<compile_context>
chip_gen: v7x
topology: tpu7x:2x2x1
jax: 0.10.0
libtpu: 0.0.40
codegen_flags: <defaults>
</compile_context>

<pallas_src>
import functools

import numpy as np
import jax
import jax.numpy as jnp
from jax.experimental import pallas as pl
from jax.experimental.pallas import tpu as pltpu

EPS = 1e-5

# MXU operand dtype. f32 at these toy shapes (keeps the numeric self-check
# tight).  TODO(synk): set jnp.bfloat16 here on v6e/v7x at real channel widths
# (weights cast once in prepare_params, activation operand once per dot below;
# BN/ReLU math stays f32 so v5e's f32-only VPU path is unaffected).
MXU_DTYPE = jnp.float32


# ----------------------------------------------------------------------------
# In-kernel helpers
# ----------------------------------------------------------------------------
def _bn_scale_bias(y, gamma, beta):
    """Training-mode BN folded to a per-channel (scale, bias) FMA.

    Single-pass statistics: one read of y yields sum and sum-of-squares,
    var = E[y^2] - mean^2 (f32 accumulation).  y: (C, M); gamma/beta: (C, 1).
    """
    inv_m = 1.0 / y.shape[1]
    mean = jnp.sum(y, axis=1, keepdims=True) * inv_m
    mean_sq = jnp.sum(y * y, axis=1, keepdims=True) * inv_m
    var = mean_sq - mean * mean
    scale = gamma * jax.lax.rsqrt(var + EPS)
    bias = beta - mean * scale
    return scale, bias


def _bn_relu(y, gamma, beta):
    scale, bias = _bn_scale_bias(y, gamma, beta)
    return jnp.maximum(y * scale + bias, 0.0)


# ----------------------------------------------------------------------------
# Fused Pallas kernel
# ----------------------------------------------------------------------------
def _bottleneck_kernel(offsets,
                       x_ref, w1_ref, g1_ref, b1_ref,
                       w2_ref, g2_ref, b2_ref,
                       w3_ref, g3_ref, b3_ref, mask_ref,
                       o_ref, tap_ref):
    xT = x_ref[...]                                   # (Cin, M) f32, lane-dense
    m = xT.shape[1]
    cmid = w1_ref.shape[0]

    # ---- conv1 (1x1) + bn1 + relu -------------------------------------------
    y1 = jnp.dot(w1_ref[...], xT.astype(MXU_DTYPE),
                 preferred_element_type=jnp.float32)  # (Cmid, M)
    y1 = _bn_relu(y1, g1_ref[...], b1_ref[...])

    # ---- conv2 (3x3, pad=1, stride=1) as ONE K=9*Cmid matmul ------------------
    # Tap t = y1 lane-rolled by offsets[t], multiplied by the precomputed
    # image-edge validity mask, written into the (9*Cmid, M) VMEM tap stack.
    masks = mask_ref[...]                             # (9, M) trace-time consts
    for t, off in enumerate(offsets):
        if off == 0:
            tap = y1                                  # centre tap: no edge mask
        else:
            rolled = pltpu.roll(y1, (-off) % m, axis=1)   # XLU lane roll
            tap = rolled * masks[t:t + 1, :]              # zero-pad image edges
        tap_ref[pl.ds(t * cmid, cmid), :] = tap
    # TODO(synk): at real M replace roll+mask with static halo slices of a
    # (Cmid, M + 2*(W+1)) scratch; masks then only touch true image-edge cols.
    y2 = jnp.dot(w2_ref[...], tap_ref[...].astype(MXU_DTYPE),
                 preferred_element_type=jnp.float32)  # (Cmid, M), MXU-internal acc
    y2 = _bn_relu(y2, g2_ref[...], b2_ref[...])

    # ---- conv3 (1x1) + bn3 + residual add + relu ------------------------------
    y3 = jnp.dot(w3_ref[...], y2.astype(MXU_DTYPE),
                 preferred_element_type=jnp.float32)  # (Cout, M)
    scale, bias = _bn_scale_bias(y3, g3_ref[...], b3_ref[...])
    # TODO(synk): identity add assumes Cout == Cin and stride 1 (downsample=None
    # in the tested module); a downsample branch needs its own conv+BN path.
    o_ref[...] = jnp.maximum(y3 * scale + bias + xT, 0.0)


# ----------------------------------------------------------------------------
# Wrapper (channel-major API; no activation transposes in the forward path)
# ----------------------------------------------------------------------------
@functools.partial(jax.jit, static_argnames=("w_sp",))
def bottleneck_forward(x_cm, params, *, w_sp):
    """x_cm: channel-major activations (Cin, M = N*H*W).  Returns (Cout, M)."""
    cin, m = x_cm.shape
    cmid = params["w1"].shape[0]
    cout = params["w3"].shape[0]
    offsets = tuple((dh - 1) * w_sp + (dw - 1)
                    for dh in range(3) for dw in range(3))

    flops = 2 * m * (cin * cmid + 9 * cmid * cmid + cmid * cout)
    bytes_accessed = 4 * (cin * m + cout * m + 9 * m
                          + cin * cmid + 9 * cmid * cmid + cmid * cout
                          + 4 * cmid + 2 * cout)

    vmem = pl.BlockSpec(memory_space=pltpu.MemorySpace.VMEM)
    # TODO(synk): at real ResNet sizes add a grid tiled over M with
    # dimension_semantics=("parallel",) (uses both v7x TensorCores), a two-pass
    # BN-statistics scheme across M tiles, an explicit vmem_limit_bytes
    # re-derived for v7x's 64 MiB VMEM, and M padded to a multiple of 128 with
    # padded columns excluded from the BN denominators.
    return pl.pallas_call(
        functools.partial(_bottleneck_kernel, offsets),
        out_shape=jax.ShapeDtypeStruct((cout, m), jnp.float32),
        in_specs=[vmem] * 11,
        out_specs=vmem,
        scratch_shapes=[pltpu.VMEM((9 * cmid, m), jnp.float32)],
        cost_estimate=pl.CostEstimate(flops=flops,
                                      transcendentals=2 * cmid + cout,
                                      bytes_accessed=bytes_accessed),
    )(x_cm, params["w1"], params["g1"], params["b1"],
      params["w2"], params["g2"], params["b2"],
      params["w3"], params["g3"], params["b3"], params["mask9"])


# ----------------------------------------------------------------------------
# One-time (outside jit) parameter / constant preparation
# ----------------------------------------------------------------------------
def _conv3x3_edge_masks(n, h, w):
    """(9, N*H*W) f32 validity masks (one per 3x3 tap), built with numpy."""
    pos = np.arange(n * h * w)
    hh = (pos // w) % h
    ww = pos % w
    rows = []
    for dh in range(3):
        for dw in range(3):
            hs, ws = hh + (dh - 1), ww + (dw - 1)
            rows.append(((hs >= 0) & (hs < h) & (ws >= 0) & (ws < w))
                        .astype(np.float32))
    return np.stack(rows, axis=0)


def prepare_params(w1_t, w2_t, w3_t, g1, b1, g2, b2, g3, b3, n, h, w):
    return {
        "w1": w1_t[:, :, 0, 0].astype(MXU_DTYPE),                    # (Cmid, Cin)
        # OIHW -> (O, kh, kw, I) -> (O, 9*I): tap-stack row for tap t = kh*3+kw,
        # input channel i lives at sublane t*Cmid + i.
        "w2": jnp.transpose(w2_t, (0, 2, 3, 1))
                 .reshape(w2_t.shape[0], -1).astype(MXU_DTYPE),      # (Cmid, 9*Cmid)
        "w3": w3_t[:, :, 0, 0].astype(MXU_DTYPE),                    # (Cout, Cmid)
        "g1": g1.reshape(-1, 1), "b1": b1.reshape(-1, 1),
        "g2": g2.reshape(-1, 1), "b2": b2.reshape(-1, 1),
        "g3": g3.reshape(-1, 1), "b3": b3.reshape(-1, 1),
        "mask9": jnp.asarray(_conv3x3_edge_masks(n, h, w)),          # (9, M)
    }


# ----------------------------------------------------------------------------
# Pure-JAX reference (mirrors the PyTorch module, training-mode BN)
# ----------------------------------------------------------------------------
def reference_forward(x_nchw, tparams):
    def conv(x, w):
        return jax.lax.conv_general_dilated(
            x, w, window_strides=(1, 1),
            padding=[(w.shape[2] // 2, w.shape[2] // 2)] * 2,
            dimension_numbers=("NCHW", "OIHW", "NCHW"))

    def bn(x, g, b):
        mean = jnp.mean(x, axis=(0, 2, 3), keepdims=True)
        var = jnp.mean((x - mean) ** 2, axis=(0, 2, 3), keepdims=True)
        xh = (x - mean) * jax.lax.rsqrt(var + EPS)
        return xh * g.reshape(1, -1, 1, 1) + b.reshape(1, -1, 1, 1)

    relu = lambda t: jnp.maximum(t, 0.0)
    out = relu(bn(conv(x_nchw, tparams["w1"]), tparams["g1"], tparams["b1"]))
    out = relu(bn(conv(out, tparams["w2"]), tparams["g2"], tparams["b2"]))
    out = bn(conv(out, tparams["w3"]), tparams["g3"], tparams["b3"])
    return relu(out + x_nchw)


# ----------------------------------------------------------------------------
# Main
# ----------------------------------------------------------------------------
if __name__ == "__main__":
    # Bottleneck(inplanes=16, planes=4): width=4, out=planes*4=16, stride=1,
    # downsample=None so the identity add is shape-compatible.
    N, INPLANES, PLANES, H, W = 2, 16, 4, 8, 8
    WIDTH = PLANES            # base_width=64, groups=1
    COUT = PLANES * 4         # expansion
    M = N * H * W
    assert M % 128 == 0       # lane-aligned (see TODO in bottleneck_forward)

    key = jax.random.PRNGKey(0)
    ks = jax.random.split(key, 10)

    # PyTorch-layout conv weights (OIHW), no bias.
    w1_t = 0.1 * jax.random.normal(ks[0], (WIDTH, INPLANES, 1, 1), jnp.float32)
    w2_t = 0.1 * jax.random.normal(ks[1], (WIDTH, WIDTH, 3, 3), jnp.float32)
    w3_t = 0.1 * jax.random.normal(ks[2], (COUT, WIDTH, 1, 1), jnp.float32)
    g1 = 1.0 + 0.1 * jax.random.normal(ks[3], (WIDTH,), jnp.float32)
    b1 = 0.1 * jax.random.normal(ks[4], (WIDTH,), jnp.float32)
    g2 = 1.0 + 0.1 * jax.random.normal(ks[5], (WIDTH,), jnp.float32)
    b2 = 0.1 * jax.random.normal(ks[6], (WIDTH,), jnp.float32)
    g3 = 1.0 + 0.1 * jax.random.normal(ks[7], (COUT,), jnp.float32)
    b3 = 0.1 * jax.random.normal(ks[8], (COUT,), jnp.float32)

    x = jax.random.normal(ks[9], (N, INPLANES, H, W), jnp.float32)

    params = prepare_params(w1_t, w2_t, w3_t, g1, b1, g2, b2, g3, b3, N, H, W)
    tparams = {"w1": w1_t, "w2": w2_t, "w3": w3_t,
               "g1": g1, "b1": b1, "g2": g2, "b2": b2, "g3": g3, "b3": b3}

    # Test-harness glue: the kernel's forward-path layout is channel-major.
    x_cm = jnp.transpose(x, (1, 0, 2, 3)).reshape(INPLANES, M)

    out_cm = bottleneck_forward(x_cm, params, w_sp=W)
    out_cm = jax.block_until_ready(out_cm)

    # Convert back to NCHW only for comparison against the reference.
    out = jnp.transpose(out_cm.reshape(COUT, N, H, W), (1, 0, 2, 3))

    ref = reference_forward(x, tparams)
    assert out.shape == (N, COUT, H, W)
    assert jnp.allclose(out, ref, rtol=1e-4, atol=1e-4), \
        f"max err {jnp.max(jnp.abs(out - ref))}"

    print("KERNEL_OK")
</pallas_src>

<mosaic_0001>
module attributes {stable_mosaic.version = 11 : i64} {
  func.func @_bottleneck_kernel(%arg0: memref<16x128xf32, #tpu.memory_space<vmem>>, %arg1: memref<4x16xf32, #tpu.memory_space<vmem>>, %arg2: memref<4x1xf32, #tpu.memory_space<vmem>>, %arg3: memref<4x1xf32, #tpu.memory_space<vmem>>, %arg4: memref<4x36xf32, #tpu.memory_space<vmem>>, %arg5: memref<4x1xf32, #tpu.memory_space<vmem>>, %arg6: memref<4x1xf32, #tpu.memory_space<vmem>>, %arg7: memref<16x4xf32, #tpu.memory_space<vmem>>, %arg8: memref<16x1xf32, #tpu.memory_space<vmem>>, %arg9: memref<16x1xf32, #tpu.memory_space<vmem>>, %arg10: memref<9x128xf32, #tpu.memory_space<vmem>>, %arg11: memref<16x128xf32, #tpu.memory_space<vmem>>, %arg12: memref<36x128xf32, #tpu.memory_space<vmem>>) attributes {dimension_semantics = [], scalar_prefetch = 0 : i64, scratch_operands = 1 : i64, tpu.core_type = #tpu.core_type<tc>} {
    %c0 = arith.constant 0 : index
    %c0_0 = arith.constant 0 : index
    %0 = vector.load %arg0[%c0, %c0_0] : memref<16x128xf32, #tpu.memory_space<vmem>>, vector<16x128xf32>
    %c0_1 = arith.constant 0 : index
    %c0_2 = arith.constant 0 : index
    %1 = vector.load %arg1[%c0_1, %c0_2] : memref<4x16xf32, #tpu.memory_space<vmem>>, vector<4x16xf32>
    %cst = arith.constant dense<0.000000e+00> : vector<4x128xf32>
    %2 = tpu.matmul %1, %0, %cst {dimension_numbers = #tpu.dot_dimension_numbers<[1], [0], [0], [1], [0, 0, 1, 1], [], []>} : vector<4x16xf32>, vector<16x128xf32>, vector<4x128xf32> -> vector<4x128xf32>
    %c0_3 = arith.constant 0 : index
    %c0_4 = arith.constant 0 : index
    %3 = vector.load %arg2[%c0_3, %c0_4] : memref<4x1xf32, #tpu.memory_space<vmem>>, vector<4x1xf32>
    %c0_5 = arith.constant 0 : index
    %c0_6 = arith.constant 0 : index
    %4 = vector.load %arg3[%c0_5, %c0_6] : memref<4x1xf32, #tpu.memory_space<vmem>>, vector<4x1xf32>
    %cst_7 = arith.constant dense<0.000000e+00> : vector<4xf32>
    %5 = vector.multi_reduction <add>, %2, %cst_7 [1] : vector<4x128xf32> to vector<4xf32>
    %6 = vector.shape_cast %5 : vector<4xf32> to vector<4x1xf32>
    %cst_8 = arith.constant 7.812500e-03 : f32
    %7 = vector.broadcast %cst_8 : f32 to vector<4x1xf32>
    %8 = arith.mulf %6, %7 : vector<4x1xf32>
    %9 = arith.mulf %2, %2 : vector<4x128xf32>
    %cst_9 = arith.constant dense<0.000000e+00> : vector<4xf32>
    %10 = vector.multi_reduction <add>, %9, %cst_9 [1] : vector<4x128xf32> to vector<4xf32>
    %11 = vector.shape_cast %10 : vector<4xf32> to vector<4x1xf32>
    %cst_10 = arith.constant 7.812500e-03 : f32
    %12 = vector.broadcast %cst_10 : f32 to vector<4x1xf32>
    %13 = arith.mulf %11, %12 : vector<4x1xf32>
    %14 = arith.mulf %8, %8 : vector<4x1xf32>
    %15 = arith.subf %13, %14 : vector<4x1xf32>
    %cst_11 = arith.constant 9.99999974E-6 : f32
    %16 = vector.broadcast %cst_11 : f32 to vector<4x1xf32>
    %17 = arith.addf %15, %16 : vector<4x1xf32>
    %18 = math.rsqrt %17 : vector<4x1xf32>
    %19 = arith.mulf %3, %18 : vector<4x1xf32>
    %20 = arith.mulf %8, %19 : vector<4x1xf32>
    %21 = arith.subf %4, %20 : vector<4x1xf32>
    %22 = vector.broadcast %19 : vector<4x1xf32> to vector<4x128xf32>
    %23 = arith.mulf %2, %22 : vector<4x128xf32>
    %24 = vector.broadcast %21 : vector<4x1xf32> to vector<4x128xf32>
    %25 = arith.addf %23, %24 : vector<4x128xf32>
    %cst_12 = arith.constant 0.000000e+00 : f32
    %26 = vector.broadcast %cst_12 : f32 to vector<4x128xf32>
    %27 = arith.maximumf %25, %26 : vector<4x128xf32>
    %c0_13 = arith.constant 0 : index
    %c0_14 = arith.constant 0 : index
    %28 = vector.load %arg10[%c0_13, %c0_14] : memref<9x128xf32, #tpu.memory_space<vmem>>, vector<9x128xf32>
    %c9_i32 = arith.constant 9 : i32
    %29 = tpu.dynamic_rotate %27 by %c9_i32 dim 1 : vector<4x128xf32>, i32 -> vector<4x128xf32>
    %30 = vector.extract_strided_slice %28 {offsets = [0, 0], sizes = [1, 128], strides = [1, 1]} : vector<9x128xf32> to vector<1x128xf32>
    %31 = vector.broadcast %30 : vector<1x128xf32> to vector<4x128xf32>
    %32 = arith.mulf %29, %31 : vector<4x128xf32>
    %c0_15 = arith.constant 0 : index
    %c0_16 = arith.constant 0 : index
    %33 = vector.load %arg12[%c0_15, %c0_16] : memref<36x128xf32, #tpu.memory_space<vmem>>, vector<4x128xf32>
    tpu.vector_store %arg12[%c0_15, %c0_16], %32 {strides = array<i32>} : memref<36x128xf32, #tpu.memory_space<vmem>>, vector<4x128xf32>,
    %c8_i32 = arith.constant 8 : i32
    %34 = tpu.dynamic_rotate %27 by %c8_i32 dim 1 : vector<4x128xf32>, i32 -> vector<4x128xf32>
    %35 = vector.extract_strided_slice %28 {offsets = [1, 0], sizes = [1, 128], strides = [1, 1]} : vector<9x128xf32> to vector<1x128xf32>
    %36 = vector.broadcast %35 : vector<1x128xf32> to vector<4x128xf32>
    %37 = arith.mulf %34, %36 : vector<4x128xf32>
    %c4 = arith.constant 4 : index
    %c0_17 = arith.constant 0 : index
    %38 = vector.load %arg12[%c4, %c0_17] : memref<36x128xf32, #tpu.memory_space<vmem>>, vector<4x128xf32>
    tpu.vector_store %arg12[%c4, %c0_17], %37 {strides = array<i32>} : memref<36x128xf32, #tpu.memory_space<vmem>>, vector<4x128xf32>,
    %c7_i32 = arith.constant 7 : i32
    %39 = tpu.dynamic_rotate %27 by %c7_i32 dim 1 : vector<4x128xf32>, i32 -> vector<4x128xf32>
    %40 = vector.extract_strided_slice %28 {offsets = [2, 0], sizes = [1, 128], strides = [1, 1]} : vector<9x128xf32> to vector<1x128xf32>
    %41 = vector.broadcast %40 : vector<1x128xf32> to vector<4x128xf32>
    %42 = arith.mulf %39, %41 : vector<4x128xf32>
    %c8 = arith.constant 8 : index
    %c0_18 = arith.constant 0 : index
    %43 = vector.load %arg12[%c8, %c0_18] : memref<36x128xf32, #tpu.memory_space<vmem>>, vector<4x128xf32>
    tpu.vector_store %arg12[%c8, %c0_18], %42 {strides = array<i32>} : memref<36x128xf32, #tpu.memory_space<vmem>>, vector<4x128xf32>,
    %c1_i32 = arith.constant 1 : i32
    %44 = tpu.dynamic_rotate %27 by %c1_i32 dim 1 : vector<4x128xf32>, i32 -> vector<4x128xf32>
    %45 = vector.extract_strided_slice %28 {offsets = [3, 0], sizes = [1, 128], strides = [1, 1]} : vector<9x128xf32> to vector<1x128xf32>
    %46 = vector.broadcast %45 : vector<1x128xf32> to vector<4x128xf32>
    %47 = arith.mulf %44, %46 : vector<4x128xf32>
    %c12 = arith.constant 12 : index
    %c0_19 = arith.constant 0 : index
    %48 = vector.load %arg12[%c12, %c0_19] : memref<36x128xf32, #tpu.memory_space<vmem>>, vector<4x128xf32>
    tpu.vector_store %arg12[%c12, %c0_19], %47 {strides = array<i32>} : memref<36x128xf32, #tpu.memory_space<vmem>>, vector<4x128xf32>,
    %c16 = arith.constant 16 : index
    %c0_20 = arith.constant 0 : index
    %49 = vector.load %arg12[%c16, %c0_20] : memref<36x128xf32, #tpu.memory_space<vmem>>, vector<4x128xf32>
    tpu.vector_store %arg12[%c16, %c0_20], %27 {strides = array<i32>} : memref<36x128xf32, #tpu.memory_space<vmem>>, vector<4x128xf32>,
    %c127_i32 = arith.constant 127 : i32
    %50 = tpu.dynamic_rotate %27 by %c127_i32 dim 1 : vector<4x128xf32>, i32 -> vector<4x128xf32>
    %51 = vector.extract_strided_slice %28 {offsets = [5, 0], sizes = [1, 128], strides = [1, 1]} : vector<9x128xf32> to vector<1x128xf32>
    %52 = vector.broadcast %51 : vector<1x128xf32> to vector<4x128xf32>
    %53 = arith.mulf %50, %52 : vector<4x128xf32>
    %c20 = arith.constant 20 : index
    %c0_21 = arith.constant 0 : index
    %54 = vector.load %arg12[%c20, %c0_21] : memref<36x128xf32, #tpu.memory_space<vmem>>, vector<4x128xf32>
    tpu.vector_store %arg12[%c20, %c0_21], %53 {strides = array<i32>} : memref<36x128xf32, #tpu.memory_space<vmem>>, vector<4x128xf32>,
    %c121_i32 = arith.constant 121 : i32
    %55 = tpu.dynamic_rotate %27 by %c121_i32 dim 1 : vector<4x128xf32>, i32 -> vector<4x128xf32>
    %56 = vector.extract_strided_slice %28 {offsets = [6, 0], sizes = [1, 128], strides = [1, 1]} : vector<9x128xf32> to vector<1x128xf32>
    %57 = vector.broadcast %56 : vector<1x128xf32> to vector<4x128xf32>
    %58 = arith.mulf %55, %57 : vector<4x128xf32>
    %c24 = arith.constant 24 : index
    %c0_22 = arith.constant 0 : index
    %59 = vector.load %arg12[%c24, %c0_22] : memref<36x128xf32, #tpu.memory_space<vmem>>, vector<4x128xf32>
    tpu.vector_store %arg12[%c24, %c0_22], %58 {strides = array<i32>} : memref<36x128xf32, #tpu.memory_space<vmem>>, vector<4x128xf32>,
    %c120_i32 = arith.constant 120 : i32
    %60 = tpu.dynamic_rotate %27 by %c120_i32 dim 1 : vector<4x128xf32>, i32 -> vector<4x128xf32>
    %61 = vector.extract_strided_slice %28 {offsets = [7, 0], sizes = [1, 128], strides = [1, 1]} : vector<9x128xf32> to vector<1x128xf32>
    %62 = vector.broadcast %61 : vector<1x128xf32> to vector<4x128xf32>
    %63 = arith.mulf %60, %62 : vector<4x128xf32>
    %c28 = arith.constant 28 : index
    %c0_23 = arith.constant 0 : index
    %64 = vector.load %arg12[%c28, %c0_23] : memref<36x128xf32, #tpu.memory_space<vmem>>, vector<4x128xf32>
    tpu.vector_store %arg12[%c28, %c0_23], %63 {strides = array<i32>} : memref<36x128xf32, #tpu.memory_space<vmem>>, vector<4x128xf32>,
    %c119_i32 = arith.constant 119 : i32
    %65 = tpu.dynamic_rotate %27 by %c119_i32 dim 1 : vector<4x128xf32>, i32 -> vector<4x128xf32>
    %66 = vector.extract_strided_slice %28 {offsets = [8, 0], sizes = [1, 128], strides = [1, 1]} : vector<9x128xf32> to vector<1x128xf32>
    %67 = vector.broadcast %66 : vector<1x128xf32> to vector<4x128xf32>
    %68 = arith.mulf %65, %67 : vector<4x128xf32>
    %c32 = arith.constant 32 : index
    %c0_24 = arith.constant 0 : index
    %69 = vector.load %arg12[%c32, %c0_24] : memref<36x128xf32, #tpu.memory_space<vmem>>, vector<4x128xf32>
    tpu.vector_store %arg12[%c32, %c0_24], %68 {strides = array<i32>} : memref<36x128xf32, #tpu.memory_space<vmem>>, vector<4x128xf32>,
    %c0_25 = arith.constant 0 : index
    %c0_26 = arith.constant 0 : index
    %70 = vector.load %arg4[%c0_25, %c0_26] : memref<4x36xf32, #tpu.memory_space<vmem>>, vector<4x36xf32>
    %c0_27 = arith.constant 0 : index
    %c0_28 = arith.constant 0 : index
    %71 = vector.load %arg12[%c0_27, %c0_28] : memref<36x128xf32, #tpu.memory_space<vmem>>, vector<36x128xf32>
    %cst_29 = arith.constant dense<0.000000e+00> : vector<4x128xf32>
    %72 = tpu.matmul %70, %71, %cst_29 {dimension_numbers = #tpu.dot_dimension_numbers<[1], [0], [0], [1], [0, 0, 1, 1], [], []>} : vector<4x36xf32>, vector<36x128xf32>, vector<4x128xf32> -> vector<4x128xf32>
    %c0_30 = arith.constant 0 : index
    %c0_31 = arith.constant 0 : index
    %73 = vector.load %arg5[%c0_30, %c0_31] : memref<4x1xf32, #tpu.memory_space<vmem>>, vector<4x1xf32>
    %c0_32 = arith.constant 0 : index
    %c0_33 = arith.constant 0 : index
    %74 = vector.load %arg6[%c0_32, %c0_33] : memref<4x1xf32, #tpu.memory_space<vmem>>, vector<4x1xf32>
    %cst_34 = arith.constant dense<0.000000e+00> : vector<4xf32>
    %75 = vector.multi_reduction <add>, %72, %cst_34 [1] : vector<4x128xf32> to vector<4xf32>
    %76 = vector.shape_cast %75 : vector<4xf32> to vector<4x1xf32>
    %cst_35 = arith.constant 7.812500e-03 : f32
    %77 = vector.broadcast %cst_35 : f32 to vector<4x1xf32>
    %78 = arith.mulf %76, %77 : vector<4x1xf32>
    %79 = arith.mulf %72, %72 : vector<4x128xf32>
    %cst_36 = arith.constant dense<0.000000e+00> : vector<4xf32>
    %80 = vector.multi_reduction <add>, %79, %cst_36 [1] : vector<4x128xf32> to vector<4xf32>
    %81 = vector.shape_cast %80 : vector<4xf32> to vector<4x1xf32>
    %cst_37 = arith.constant 7.812500e-03 : f32
    %82 = vector.broadcast %cst_37 : f32 to vector<4x1xf32>
    %83 = arith.mulf %81, %82 : vector<4x1xf32>
    %84 = arith.mulf %78, %78 : vector<4x1xf32>
    %85 = arith.subf %83, %84 : vector<4x1xf32>
    %cst_38 = arith.constant 9.99999974E-6 : f32
    %86 = vector.broadcast %cst_38 : f32 to vector<4x1xf32>
    %87 = arith.addf %85, %86 : vector<4x1xf32>
    %88 = math.rsqrt %87 : vector<4x1xf32>
    %89 = arith.mulf %73, %88 : vector<4x1xf32>
    %90 = arith.mulf %78, %89 : vector<4x1xf32>
    %91 = arith.subf %74, %90 : vector<4x1xf32>
    %92 = vector.broadcast %89 : vector<4x1xf32> to vector<4x128xf32>
    %93 = arith.mulf %72, %92 : vector<4x128xf32>
    %94 = vector.broadcast %91 : vector<4x1xf32> to vector<4x128xf32>
    %95 = arith.addf %93, %94 : vector<4x128xf32>
    %cst_39 = arith.constant 0.000000e+00 : f32
    %96 = vector.broadcast %cst_39 : f32 to vector<4x128xf32>
    %97 = arith.maximumf %95, %96 : vector<4x128xf32>
    %c0_40 = arith.constant 0 : index
    %c0_41 = arith.constant 0 : index
    %98 = vector.load %arg7[%c0_40, %c0_41] : memref<16x4xf32, #tpu.memory_space<vmem>>, vector<16x4xf32>
    %cst_42 = arith.constant dense<0.000000e+00> : vector<16x128xf32>
    %99 = tpu.matmul %98, %97, %cst_42 {dimension_numbers = #tpu.dot_dimension_numbers<[1], [0], [0], [1], [0, 0, 1, 1], [], []>} : vector<16x4xf32>, vector<4x128xf32>, vector<16x128xf32> -> vector<16x128xf32>
    %c0_43 = arith.constant 0 : index
    %c0_44 = arith.constant 0 : index
    %100 = vector.load %arg8[%c0_43, %c0_44] : memref<16x1xf32, #tpu.memory_space<vmem>>, vector<16x1xf32>
    %c0_45 = arith.constant 0 : index
    %c0_46 = arith.constant 0 : index
    %101 = vector.load %arg9[%c0_45, %c0_46] : memref<16x1xf32, #tpu.memory_space<vmem>>, vector<16x1xf32>
    %cst_47 = arith.constant dense<0.000000e+00> : vector<16xf32>
    %102 = vector.multi_reduction <add>, %99, %cst_47 [1] : vector<16x128xf32> to vector<16xf32>
    %103 = vector.shape_cast %102 : vector<16xf32> to vector<16x1xf32>
    %cst_48 = arith.constant 7.812500e-03 : f32
    %104 = vector.broadcast %cst_48 : f32 to vector<16x1xf32>
    %105 = arith.mulf %103, %104 : vector<16x1xf32>
    %106 = arith.mulf %99, %99 : vector<16x128xf32>
    %cst_49 = arith.constant dense<0.000000e+00> : vector<16xf32>
    %107 = vector.multi_reduction <add>, %106, %cst_49 [1] : vector<16x128xf32> to vector<16xf32>
    %108 = vector.shape_cast %107 : vector<16xf32> to vector<16x1xf32>
    %cst_50 = arith.constant 7.812500e-03 : f32
    %109 = vector.broadcast %cst_50 : f32 to vector<16x1xf32>
    %110 = arith.mulf %108, %109 : vector<16x1xf32>
    %111 = arith.mulf %105, %105 : vector<16x1xf32>
    %112 = arith.subf %110, %111 : vector<16x1xf32>
    %cst_51 = arith.constant 9.99999974E-6 : f32
    %113 = vector.broadcast %cst_51 : f32 to vector<16x1xf32>
    %114 = arith.addf %112, %113 : vector<16x1xf32>
    %115 = math.rsqrt %114 : vector<16x1xf32>
    %116 = arith.mulf %100, %115 : vector<16x1xf32>
    %117 = arith.mulf %105, %116 : vector<16x1xf32>
    %118 = arith.subf %101, %117 : vector<16x1xf32>
    %119 = vector.broadcast %116 : vector<16x1xf32> to vector<16x128xf32>
    %120 = arith.mulf %99, %119 : vector<16x128xf32>
    %121 = vector.broadcast %118 : vector<16x1xf32> to vector<16x128xf32>
    %122 = arith.addf %120, %121 : vector<16x128xf32>
    %123 = arith.addf %122, %0 : vector<16x128xf32>
    %cst_52 = arith.constant 0.000000e+00 : f32
    %124 = vector.broadcast %cst_52 : f32 to vector<16x128xf32>
    %125 = arith.maximumf %123, %124 : vector<16x128xf32>
    %c0_53 = arith.constant 0 : index
    %c0_54 = arith.constant 0 : index
    %126 = vector.load %arg11[%c0_53, %c0_54] : memref<16x128xf32, #tpu.memory_space<vmem>>, vector<16x128xf32>
    tpu.vector_store %arg11[%c0_53, %c0_54], %125 {strides = array<i32>} : memref<16x128xf32, #tpu.memory_space<vmem>>, vector<16x128xf32>,
    return
  }
}

</mosaic_0001>

<llo_original>
// kernel: bottleneck_forward.1
$region0: #{bottleneck_forward.1}
  #allocation0 [shape = 'u32[]', space=smem, size = 0x4, offset = 0x4, fixed_abs, tag = 'smem constant byte address 0x4 - core index']
  #allocation1 [shape = 'u32[144,128]{1,0:T(1,128)}', space=vmem, size = 0x12000, scoped, tag = 'internal scratch']
  #allocation2 [shape = 'f32[36,128]{1,0:T(8,128)}', space=vmem, size = 0x5000, scoped, tag = 'scratch operand']
  %s0 = inlined_call_operand.vmem [shape: f32[16,128], index: 0, kind: input, shape index: {}]
  %s1 = inlined_call_operand.vmem [shape: f32[4,16], index: 1, kind: input, shape index: {}]
  %s2 = inlined_call_operand.vmem [shape: f32[4,1], index: 2, kind: input, shape index: {}]
  %s3 = inlined_call_operand.vmem [shape: f32[4,1], index: 3, kind: input, shape index: {}]
  %s4 = inlined_call_operand.vmem [shape: f32[4,36], index: 4, kind: input, shape index: {}]
  %s5 = inlined_call_operand.vmem [shape: f32[4,1], index: 5, kind: input, shape index: {}]
  %s6 = inlined_call_operand.vmem [shape: f32[4,1], index: 6, kind: input, shape index: {}]
  %s7 = inlined_call_operand.vmem [shape: f32[16,4], index: 7, kind: input, shape index: {}]
  %s8 = inlined_call_operand.vmem [shape: f32[16,1], index: 8, kind: input, shape index: {}]
  %s9 = inlined_call_operand.vmem [shape: f32[16,1], index: 9, kind: input, shape index: {}]
  %s10 = inlined_call_operand.vmem [shape: f32[9,128], index: 10, kind: input, shape index: {}]
  %s11 = inlined_call_operand.hbm [shape: f32[16,128], index: 11, kind: output, shape index: {}]
  %s12 = sld [smem:[#allocation0]]
  $region54: #{bottleneck_forward.1} parent=0
    _
  %s14 = ssub.s32 1, %s12
  %s15 = scalar_select 0, %s14, %s12
  $region1: #{bottleneck_forward.1} parent=0
    #allocation3 [shape = 'u8[8192]{0}', space=vmem, size = 0x2000, scoped, tag = 'output window, operand 0, single buffered']
    #allocation4 [shape = 's32[1]{0}', space=sflag, size = 0x4, scoped, tag = 'scoped memory for bottleneck_forward.1']
    %16 = vsyncpa [#allocation4], 0
    // Predicated region
    $region2: #{bottleneck_forward.1} parent=1 // pred_check
      _
    $region3: #{bottleneck_forward.1} parent=1 // pred_check_branch
      %18 = sbr.rel (0) target = $region5
    $region4: #{bottleneck_forward.1} parent=1 // pred_region
      _
    $region5: #{bottleneck_forward.1} parent=1 // pred_fallthru
      _
    // Predicated region
    $region6: #{bottleneck_forward.1} parent=1 // pred_check
      _
    $region7: #{bottleneck_forward.1} parent=1 // pred_check_branch
      %20 = sbr.rel (0) target = $region9
    $region8: #{bottleneck_forward.1} parent=1 // pred_region
      _
    $region9: #{bottleneck_forward.1} parent=1 // pred_fallthru
      _
    // Predicated region
    $region10: #{bottleneck_forward.1} parent=1 // pred_check
      _
    $region11: #{bottleneck_forward.1} parent=1 // pred_check_branch
      %22 = sbr.rel (0) target = $region13
    $region12: #{bottleneck_forward.1} parent=1 // pred_region
      _
    $region13: #{bottleneck_forward.1} parent=1 // pred_fallthru
      _
    // Predicated region
    $region14: #{bottleneck_forward.1} parent=1 // pred_check
      _
    $region15: #{bottleneck_forward.1} parent=1 // pred_check_branch
      %24 = sbr.rel (0) target = $region17
    $region16: #{bottleneck_forward.1} parent=1 // pred_region
      _
    $region17: #{bottleneck_forward.1} parent=1 // pred_fallthru
      _
    // Predicated region
    $region18: #{bottleneck_forward.1} parent=1 // pred_check
      _
    $region19: #{bottleneck_forward.1} parent=1 // pred_check_branch
      %26 = sbr.rel (0) target = $region21
    $region20: #{bottleneck_forward.1} parent=1 // pred_region
      _
    $region21: #{bottleneck_forward.1} parent=1 // pred_fallthru
      _
    // Predicated region
    $region22: #{bottleneck_forward.1} parent=1 // pred_check
      _
    $region23: #{bottleneck_forward.1} parent=1 // pred_check_branch
      %28 = sbr.rel (0) target = $region25
    $region24: #{bottleneck_forward.1} parent=1 // pred_region
      _
    $region25: #{bottleneck_forward.1} parent=1 // pred_fallthru
      _
    // Predicated region
    $region26: #{bottleneck_forward.1} parent=1 // pred_check
      _
    $region27: #{bottleneck_forward.1} parent=1 // pred_check_branch
      %30 = sbr.rel (0) target = $region29
    $region28: #{bottleneck_forward.1} parent=1 // pred_region
      _
    $region29: #{bottleneck_forward.1} parent=1 // pred_fallthru
      _
    // Predicated region
    $region30: #{bottleneck_forward.1} parent=1 // pred_check
      _
    $region31: #{bottleneck_forward.1} parent=1 // pred_check_branch
      %32 = sbr.rel (0) target = $region33
    $region32: #{bottleneck_forward.1} parent=1 // pred_region
      _
    $region33: #{bottleneck_forward.1} parent=1 // pred_fallthru
      _
    // Predicated region
    $region34: #{bottleneck_forward.1} parent=1 // pred_check
      _
    $region35: #{bottleneck_forward.1} parent=1 // pred_check_branch
      %34 = sbr.rel (0) target = $region37
    $region36: #{bottleneck_forward.1} parent=1 // pred_region
      _
    $region37: #{bottleneck_forward.1} parent=1 // pred_fallthru
      _
    // Predicated region
    $region38: #{bottleneck_forward.1} parent=1 // pred_check
      _
    $region39: #{bottleneck_forward.1} parent=1 // pred_check_branch
      %36 = sbr.rel (0) target = $region41
    $region40: #{bottleneck_forward.1} parent=1 // pred_region
      _
    $region41: #{bottleneck_forward.1} parent=1 // pred_fallthru
      _
    // Predicated region
    $region42: #{bottleneck_forward.1} parent=1 // pred_check
      _
    $region43: #{bottleneck_forward.1} parent=1 // pred_check_branch
      %38 = sbr.rel (0) target = $region45
    $region44: #{bottleneck_forward.1} parent=1 // pred_region
      _
    $region45: #{bottleneck_forward.1} parent=1 // pred_fallthru
      _
    %v39 = vld [vmem:[%s0] sm:$0xff]
    %v40 = vld [vmem:[%s0 + $0x8] sm:$0xff]
    %v41 = vld [vmem:[%s1] sm:$0xf]
    %vm42 = vcmask 130048
    %v44 = vsel %vm42, %v41, 0
    %46 = vmatprep.subr.mxu0 0.0
    %47 = vmatpush1.msra.mxu0 %v39
    %48 = vmatprep.subr.mxu0 0.0
    %49 = vmatpush1.msra.mxu0 %v40
    %50 = vmatprep.subr.mxu0 0.0
    %51 = vmatpush1.msra.mxu0 0.0
    %52 = vmatprep.subr.mxu0 0.0
    %53 = vmatpush1.msra.mxu0 0.0
    %54 = vmatprep.subr.mxu0 0.0
    %55 = vmatpush1.msra.mxu0 0.0
    %56 = vmatprep.subr.mxu0 0.0
    %57 = vmatpush1.msra.mxu0 0.0
    %58 = vmatprep.subr.mxu0 0.0
    %59 = vmatpush1.msra.mxu0 0.0
    %60 = vmatprep.subr.mxu0 0.0
    %61 = vmatpush1.msra.mxu0 0.0
    %62 = vmatprep.subr.mxu0 0.0
    %63 = vmatpush1.msra.mxu0 0.0
    %64 = vmatprep.subr.mxu0 0.0
    %65 = vmatpush1.msra.mxu0 0.0
    %66 = vmatprep.subr.mxu0 0.0
    %67 = vmatpush1.msra.mxu0 0.0
    %68 = vmatprep.subr.mxu0 0.0
    %69 = vmatpush1.msra.mxu0 0.0
    %70 = vmatprep.subr.mxu0 0.0
    %71 = vmatpush1.msra.mxu0 0.0
    %72 = vmatprep.subr.mxu0 0.0
    %73 = vmatpush1.msra.mxu0 0.0
    %74 = vmatprep.subr.mxu0 0.0
    %75 = vmatpush1.msra.mxu0 0.0
    %76 = vmatprep.subr.mxu0 0.0
    %77 = vmatpush1.msra.mxu0 0.0
    %78 = vmatprep.subr.mxu0 0.0
    %79 = vmatpush1.msra.mxu0 0.0
    %80 = vmatprep.subr.mxu0 0.0
    %81 = vmatpush1.msra.mxu0 0.0
    %82 = vmatprep.subr.mxu0 0.0
    %83 = vmatpush1.msra.mxu0 0.0
    %84 = vmatprep.subr.mxu0 0.0
    %85 = vmatpush1.msra.mxu0 0.0
    %86 = vmatprep.subr.mxu0 0.0
    %87 = vmatpush1.msra.mxu0 0.0
    %88 = vmatprep.subr.mxu0 0.0
    %89 = vmatpush1.msra.mxu0 0.0
    %90 = vmatprep.subr.mxu0 0.0
    %91 = vmatpush1.msra.mxu0 0.0
    %92 = vmatprep.subr.mxu0 0.0
    %93 = vmatpush1.msra.mxu0 0.0
    %94 = vmatprep.subr.mxu0 0.0
    %95 = vmatpush1.msra.mxu0 0.0
    %96 = vmatprep.subr.mxu0 0.0
    %97 = vmatpush1.msra.mxu0 0.0
    %98 = vmatprep.subr.mxu0 0.0
    %99 = vmatpush1.msra.mxu0 0.0
    %100 = vmatprep.subr.mxu0 0.0
    %101 = vmatpush1.msra.mxu0 0.0
    %102 = vmatprep.subr.mxu0 0.0
    %103 = vmatpush1.msra.mxu0 0.0
    %104 = vmatprep.subr.mxu0 0.0
    %105 = vmatpush1.msra.mxu0 0.0
    %106 = vmatprep.subr.mxu0 0.0
    %107 = vmatpush1.msra.mxu0 0.0
    %108 = vmatprep.subr.mxu0 0.0
    %109 = vmatpush1.msra.mxu0 0.0
    %110 = vmatprep.mubr.f32.mxu0 0.0
    %111 = vmatmul.mubr.f32.gmra.mrb[0].mxu0 %v44
    %v112 = vpop.f32.mrb[0].mxu0
    %v113 = vadd.f32 0.0, %v112
    %v114 = vpop.f32.mrb[0].mxu0
    %115 = vdwg.mxu0
    %v116 = vld [vmem:[%s2] sm:$0xf]
    %v117 = vld [vmem:[%s3] sm:$0xf]
    %vm118 = vcmask 1043456
    %v119 = vsel %vm118, %v113, 0.0
    %120 = vadd.xlane.f32.xlu0 %v119
    %v121 = vpop.xlane.xlu0 %120
    %v122 = vmul.f32 %v121, 0.0078125
    %v123 = vmul.f32 %v113, %v113
    %v124 = vsel %vm118, %v123, 0.0
    %125 = vadd.xlane.f32.xlu0 %v124
    %v126 = vpop.xlane.xlu0 %125
    %v127 = vmul.f32 %v126, 0.0078125
    %v128 = vmul.f32 %v122, %v122
    %v129 = vsub.f32 %v127, %v128
    %v130 = vadd.f32 %v129, 1e-05
    %v131 = vrsqrt.pop %v130
    %v132 = vmul.f32 %v116, %v131
    %v133 = vmul.f32 %v122, %v132
    %v134 = vsub.f32 %v117, %v133
    %136 = vset.pattern.permute.xlu0 0
    %137 = vperm.xlu0 %136, %v132
    %v138 = vpop.permute.xlu0 %137
    %v140 = vmul.f32 %v113, %v138
    %142 = vset.pattern.permute.xlu0 0
    %143 = vperm.xlu0 %142, %v134
    %v144 = vpop.permute.xlu0 %143
    %v146 = vadd.f32 %v140, %v144
    %v147 = vmax.f32 %v146, 0.0
    %v148 = vld [vmem:[%s10] sm:$0xff]
    %v149 = vld [vmem:[%s10 + $0x8] sm:$0x1]
    %150 = vrot.lane.b32.xlu0 %v147, 9
    %v151 = vpop.permute.xlu0 %150
    %v152 = vlaneseq
    %v153 = vshrl.u32 %v152, 7
    %v154 = vsub.s32 0, %v153
    %v155 = vrot.slane %v148, %v154
    %v156 = vmul.f32 %v151, %v155
    %157 = vst [vmem:[#allocation2] sm:$0xf] %v156
    %158 = vrot.lane.b32.xlu0 %v147, 8
    %v159 = vpop.permute.xlu0 %158
    %v160 = vlaneseq
    %v161 = vshrl.u32 %v160, 7
    %v162 = vsub.s32 1, %v161
    %v163 = vrot.slane %v148, %v162
    %v164 = vmul.f32 %v159, %v163
    %165 = vst [vmem:[#allocation2 + $0x4] sm:$0xf] %v164
    %166 = vrot.lane.b32.xlu0 %v147, 7
    %v167 = vpop.permute.xlu0 %166
    %v168 = vlaneseq
    %v169 = vshrl.u32 %v168, 7
    %v170 = vsub.s32 2, %v169
    %v171 = vrot.slane %v148, %v170
    %v172 = vmul.f32 %v167, %v171
    %173 = vst [vmem:[#allocation2 + $0x8] sm:$0xf] %v172
    %174 = vrot.lane.b32.xlu0 %v147, 1
    %v175 = vpop.permute.xlu0 %174
    %v176 = vlaneseq
    %v177 = vshrl.u32 %v176, 7
    %v178 = vsub.s32 3, %v177
    %v179 = vrot.slane %v148, %v178
    %v180 = vmul.f32 %v175, %v179
    %181 = vst [vmem:[#allocation2 + $0xc] sm:$0xf] %v180
    %182 = vst [vmem:[#allocation2 + $0x10] sm:$0xf] %v147
    %183 = vrot.lane.b32.xlu0 %v147, 127
    %v184 = vpop.permute.xlu0 %183
    %v185 = vlaneseq
    %v186 = vshrl.u32 %v185, 7
    %v187 = vsub.s32 5, %v186
    %v188 = vrot.slane %v148, %v187
    %v189 = vmul.f32 %v184, %v188
    %190 = vst [vmem:[#allocation2 + $0x14] sm:$0xf] %v189
    %191 = vrot.lane.b32.xlu0 %v147, 121
    %v192 = vpop.permute.xlu0 %191
    %v193 = vlaneseq
    %v194 = vshrl.u32 %v193, 7
    %v195 = vsub.s32 6, %v194
    %v196 = vrot.slane %v148, %v195
    %v197 = vmul.f32 %v192, %v196
    %198 = vst [vmem:[#allocation2 + $0x18] sm:$0xf] %v197
    %199 = vrot.lane.b32.xlu0 %v147, 120
    %v200 = vpop.permute.xlu0 %199
    %v201 = vlaneseq
    %v202 = vshrl.u32 %v201, 7
    %v203 = vsub.s32 7, %v202
    %v204 = vrot.slane %v148, %v203
    %v205 = vmul.f32 %v200, %v204
    %206 = vst [vmem:[#allocation2 + $0x1c] sm:$0xf] %v205
    %207 = vrot.lane.b32.xlu0 %v147, 119
    %v208 = vpop.permute.xlu0 %207
    %v209 = vlaneseq
    %v210 = vshrl.u32 %v209, 7
    %v211 = vsub.s32 0, %v210
    %v212 = vrot.slane %v149, %v211
    %v213 = vmul.f32 %v208, %v212
    %214 = vst [vmem:[#allocation2 + $0x20] sm:$0xf] %v213
    %v215 = vld [vmem:[%s4] sm:$0xf]
    %v216 = vld [vmem:[#allocation2] sm:$0xff]
    %v217 = vld [vmem:[#allocation2 + $0x8] sm:$0xff]
    %v218 = vld [vmem:[#allocation2 + $0x10] sm:$0xff]
    %v219 = vld [vmem:[#allocation2 + $0x18] sm:$0xff]
    %v220 = vld [vmem:[#allocation2 + $0x20] sm:$0xf]
    %vm221 = vcmask 293888
    %v223 = vsel %vm221, %v215, 0
    %v226 = vsel %vm118, %v220, 0
    %228 = vmatprep.subr.mxu0 0.0
    %229 = vmatpush1.msra.mxu0 %v216
    %230 = vmatprep.subr.mxu0 0.0
    %231 = vmatpush1.msra.mxu0 %v217
    %232 = vmatprep.subr.mxu0 0.0
    %233 = vmatpush1.msra.mxu0 %v218
    %234 = vmatprep.subr.mxu0 0.0
    %235 = vmatpush1.msra.mxu0 %v219
    %236 = vmatprep.subr.mxu0 0.0
    %237 = vmatpush1.msra.mxu0 %v226
    %238 = vmatprep.subr.mxu0 0.0
    %239 = vmatpush1.msra.mxu0 0.0
    %240 = vmatprep.subr.mxu0 0.0
    %241 = vmatpush1.msra.mxu0 0.0
    %242 = vmatprep.subr.mxu0 0.0
    %243 = vmatpush1.msra.mxu0 0.0
    %244 = vmatprep.subr.mxu0 0.0
    %245 = vmatpush1.msra.mxu0 0.0
    %246 = vmatprep.subr.mxu0 0.0
    %247 = vmatpush1.msra.mxu0 0.0
    %248 = vmatprep.subr.mxu0 0.0
    %249 = vmatpush1.msra.mxu0 0.0
    %250 = vmatprep.subr.mxu0 0.0
    %251 = vmatpush1.msra.mxu0 0.0
    %252 = vmatprep.subr.mxu0 0.0
    %253 = vmatpush1.msra.mxu0 0.0
    %254 = vmatprep.subr.mxu0 0.0
    %255 = vmatpush1.msra.mxu0 0.0
    %256 = vmatprep.subr.mxu0 0.0
    %257 = vmatpush1.msra.mxu0 0.0
    %258 = vmatprep.subr.mxu0 0.0
    %259 = vmatpush1.msra.mxu0 0.0
    %260 = vmatprep.subr.mxu0 0.0
    %261 = vmatpush1.msra.mxu0 0.0
    %262 = vmatprep.subr.mxu0 0.0
    %263 = vmatpush1.msra.mxu0 0.0
    %264 = vmatprep.subr.mxu0 0.0
    %265 = vmatpush1.msra.mxu0 0.0
    %266 = vmatprep.subr.mxu0 0.0
    %267 = vmatpush1.msra.mxu0 0.0
    %268 = vmatprep.subr.mxu0 0.0
    %269 = vmatpush1.msra.mxu0 0.0
    %270 = vmatprep.subr.mxu0 0.0
    %271 = vmatpush1.msra.mxu0 0.0
    %272 = vmatprep.subr.mxu0 0.0
    %273 = vmatpush1.msra.mxu0 0.0
    %274 = vmatprep.subr.mxu0 0.0
    %275 = vmatpush1.msra.mxu0 0.0
    %276 = vmatprep.subr.mxu0 0.0
    %277 = vmatpush1.msra.mxu0 0.0
    %278 = vmatprep.subr.mxu0 0.0
    %279 = vmatpush1.msra.mxu0 0.0
    %280 = vmatprep.subr.mxu0 0.0
    %281 = vmatpush1.msra.mxu0 0.0
    %282 = vmatprep.subr.mxu0 0.0
    %283 = vmatpush1.msra.mxu0 0.0
    %284 = vmatprep.subr.mxu0 0.0
    %285 = vmatpush1.msra.mxu0 0.0
    %286 = vmatprep.subr.mxu0 0.0
    %287 = vmatpush1.msra.mxu0 0.0
    %288 = vmatprep.subr.mxu0 0.0
    %289 = vmatpush1.msra.mxu0 0.0
    %290 = vmatprep.subr.mxu0 0.0
    %291 = vmatpush1.msra.mxu0 0.0
    %292 = vmatprep.mubr.f32.mxu0 0.0
    %293 = vmatmul.mubr.f32.gmra.mrb[0].mxu0 %v223
    %v294 = vpop.f32.mrb[0].mxu0
    %v295 = vadd.f32 0.0, %v294
    %v296 = vpop.f32.mrb[0].mxu0
    %297 = vdwg.mxu0
    %v298 = vld [vmem:[%s5] sm:$0xf]
    %v299 = vld [vmem:[%s6] sm:$0xf]
    %v300 = vsel %vm118, %v295, 0.0
    %301 = vadd.xlane.f32.xlu0 %v300
    %v302 = vpop.xlane.xlu0 %301
    %v303 = vmul.f32 %v302, 0.0078125
    %v304 = vmul.f32 %v295, %v295
    %v305 = vsel %vm118, %v304, 0.0
    %306 = vadd.xlane.f32.xlu0 %v305
    %v307 = vpop.xlane.xlu0 %306
    %v308 = vmul.f32 %v307, 0.0078125
    %v309 = vmul.f32 %v303, %v303
    %v310 = vsub.f32 %v308, %v309
    %v311 = vadd.f32 %v310, 1e-05
    %v312 = vrsqrt.pop %v311
    %v313 = vmul.f32 %v298, %v312
    %v314 = vmul.f32 %v303, %v313
    %v315 = vsub.f32 %v299, %v314
    %317 = vset.pattern.permute.xlu0 0
    %318 = vperm.xlu0 %317, %v313
    %v319 = vpop.permute.xlu0 %318
    %v321 = vmul.f32 %v295, %v319
    %323 = vset.pattern.permute.xlu0 0
    %324 = vperm.xlu0 %323, %v315
    %v325 = vpop.permute.xlu0 %324
    %v327 = vadd.f32 %v321, %v325
    %v328 = vmax.f32 %v327, 0.0
    %v329 = vld [vmem:[%s7] sm:$0xff]
    %v330 = vld [vmem:[%s7 + $0x8] sm:$0xff]
    %vm331 = vcmask 31744
    %v333 = vsel %vm331, %v329, 0
    %v336 = vsel %vm331, %v330, 0
    %v339 = vsel %vm118, %v328, 0
    %341 = vmatprep.subr.mxu0 0.0
    %342 = vmatpush1.msra.mxu0 %v339
    %343 = vmatprep.subr.mxu0 0.0
    %344 = vmatpush1.msra.mxu0 0.0
    %345 = vmatprep.subr.mxu0 0.0
    %346 = vmatpush1.msra.mxu0 0.0
    %347 = vmatprep.subr.mxu0 0.0
    %348 = vmatpush1.msra.mxu0 0.0
    %349 = vmatprep.subr.mxu0 0.0
    %350 = vmatpush1.msra.mxu0 0.0
    %351 = vmatprep.subr.mxu0 0.0
    %352 = vmatpush1.msra.mxu0 0.0
    %353 = vmatprep.subr.mxu0 0.0
    %354 = vmatpush1.msra.mxu0 0.0
    %355 = vmatprep.subr.mxu0 0.0
    %356 = vmatpush1.msra.mxu0 0.0
    %357 = vmatprep.subr.mxu0 0.0
    %358 = vmatpush1.msra.mxu0 0.0
    %359 = vmatprep.subr.mxu0 0.0
    %360 = vmatpush1.msra.mxu0 0.0
    %361 = vmatprep.subr.mxu0 0.0
    %362 = vmatpush1.msra.mxu0 0.0
    %363 = vmatprep.subr.mxu0 0.0
    %364 = vmatpush1.msra.mxu0 0.0
    %365 = vmatprep.subr.mxu0 0.0
    %366 = vmatpush1.msra.mxu0 0.0
    %367 = vmatprep.subr.mxu0 0.0
    %368 = vmatpush1.msra.mxu0 0.0
    %369 = vmatprep.subr.mxu0 0.0
    %370 = vmatpush1.msra.mxu0 0.0
    %371 = vmatprep.subr.mxu0 0.0
    %372 = vmatpush1.msra.mxu0 0.0
    %373 = vmatprep.subr.mxu0 0.0
    %374 = vmatpush1.msra.mxu0 0.0
    %375 = vmatprep.subr.mxu0 0.0
    %376 = vmatpush1.msra.mxu0 0.0
    %377 = vmatprep.subr.mxu0 0.0
    %378 = vmatpush1.msra.mxu0 0.0
    %379 = vmatprep.subr.mxu0 0.0
    %380 = vmatpush1.msra.mxu0 0.0
    %381 = vmatprep.subr.mxu0 0.0
    %382 = vmatpush1.msra.mxu0 0.0
    %383 = vmatprep.subr.mxu0 0.0
    %384 = vmatpush1.msra.mxu0 0.0
    %385 = vmatprep.subr.mxu0 0.0
    %386 = vmatpush1.msra.mxu0 0.0
    %387 = vmatprep.subr.mxu0 0.0
    %388 = vmatpush1.msra.mxu0 0.0
    %389 = vmatprep.subr.mxu0 0.0
    %390 = vmatpush1.msra.mxu0 0.0
    %391 = vmatprep.subr.mxu0 0.0
    %392 = vmatpush1.msra.mxu0 0.0
    %393 = vmatprep.subr.mxu0 0.0
    %394 = vmatpush1.msra.mxu0 0.0
    %395 = vmatprep.subr.mxu0 0.0
    %396 = vmatpush1.msra.mxu0 0.0
    %397 = vmatprep.subr.mxu0 0.0
    %398 = vmatpush1.msra.mxu0 0.0
    %399 = vmatprep.subr.mxu0 0.0
    %400 = vmatpush1.msra.mxu0 0.0
    %401 = vmatprep.subr.mxu0 0.0
    %402 = vmatpush1.msra.mxu0 0.0
    %403 = vmatprep.subr.mxu0 0.0
    %404 = vmatpush1.msra.mxu0 0.0
    %405 = vmatprep.mubr.f32.mxu0 0.0
    %406 = vmatmul.mubr.f32.gmra.mrb[0].mxu0 %v333
    %v407 = vpop.f32.mrb[0].mxu0
    %v408 = vadd.f32 0.0, %v407
    %v409 = vpop.f32.mrb[0].mxu0
    %410 = vmatprep.mubr.f32.mxu0 0.0
    %411 = vmatmul.mubr.f32.gmra.mrb[0].mxu0 %v336
    %v412 = vpop.f32.mrb[0].mxu0
    %v413 = vadd.f32 0.0, %v412
    %v414 = vpop.f32.mrb[0].mxu0
    %415 = vdwg.mxu0
    %v416 = vld [vmem:[%s8] sm:$0xff]
    %v417 = vld [vmem:[%s8 + $0x8] sm:$0xff]
    %v418 = vld [vmem:[%s9] sm:$0xff]
    %v419 = vld [vmem:[%s9 + $0x8] sm:$0xff]
    %420 = vadd.xlane.f32.xlu0 %v408
    %v421 = vpop.xlane.xlu0 %420
    %422 = vadd.xlane.f32.xlu0 %v413
    %v423 = vpop.xlane.xlu0 %422
    %v424 = vmul.f32 %v421, 0.0078125
    %v425 = vmul.f32 %v423, 0.0078125
    %v426 = vmul.f32 %v408, %v408
    %v427 = vmul.f32 %v413, %v413
    %428 = vadd.xlane.f32.xlu0 %v426
    %v429 = vpop.xlane.xlu0 %428
    %430 = vadd.xlane.f32.xlu0 %v427
    %v431 = vpop.xlane.xlu0 %430
    %v432 = vmul.f32 %v429, 0.0078125
    %v433 = vmul.f32 %v431, 0.0078125
    %v434 = vmul.f32 %v424, %v424
    %v435 = vmul.f32 %v425, %v425
    %v436 = vsub.f32 %v432, %v434
    %v437 = vsub.f32 %v433, %v435
    %v438 = vadd.f32 %v436, 1e-05
    %v439 = vadd.f32 %v437, 1e-05
    %v440 = vrsqrt.pop %v438
    %v441 = vrsqrt.pop %v439
    %v442 = vmul.f32 %v416, %v440
    %v443 = vmul.f32 %v417, %v441
    %v444 = vmul.f32 %v424, %v442
    %v445 = vmul.f32 %v425, %v443
    %v446 = vsub.f32 %v418, %v444
    %v447 = vsub.f32 %v419, %v445
    %449 = vset.pattern.permute.xlu0 0
    %450 = vperm.xlu0 %449, %v442
    %v451 = vpop.permute.xlu0 %450
    %454 = vset.pattern.permute.xlu0 0
    %455 = vperm.xlu0 %454, %v443
    %v456 = vpop.permute.xlu0 %455
    %v458 = vmul.f32 %v408, %v451
    %v459 = vmul.f32 %v413, %v456
    %461 = vset.pattern.permute.xlu0 0
    %462 = vperm.xlu0 %461, %v446
    %v463 = vpop.permute.xlu0 %462
    %466 = vset.pattern.permute.xlu0 0
    %467 = vperm.xlu0 %466, %v447
    %v468 = vpop.permute.xlu0 %467
    %v470 = vadd.f32 %v458, %v463
    %v471 = vadd.f32 %v459, %v468
    %v472 = vadd.f32 %v470, %v39
    %v473 = vadd.f32 %v471, %v40
    %v474 = vmax.f32 %v472, 0.0
    %v475 = vmax.f32 %v473, 0.0
    %476 = vst [vmem:[#allocation3] sm:$0xff] %v474
    %477 = vst [vmem:[#allocation3 + $0x8] sm:$0xff] %v475
    // Predicated region
    $region46: #{bottleneck_forward.1} parent=1 // pred_check
      _
    $region47: #{bottleneck_forward.1} parent=1 // pred_check_branch
      %479 = sbr.rel (0) target = $region49
    $region48: #{bottleneck_forward.1} parent=1 // pred_region
      %s481 = ssub.s32 256, 256
      %482 = vsyncadd [#allocation4], %s481
      %s483 = sshll.u32 [#allocation3], 4
      %s484 = int_to_ptr.vmem [resolvable:$true] %s483
      %489 = dma.vmem_to_hbm [thread:$0]  %s484, 256, %s11, [#allocation4], 128, 128, 8
    $region49: #{bottleneck_forward.1} parent=1 // pred_fallthru
      _
    // Predicated region
    $region50: #{bottleneck_forward.1} parent=1 // pred_check
      _
    $region51: #{bottleneck_forward.1} parent=1 // pred_check_branch
      %491 = sbr.rel (0) target = $region53
    $region52: #{bottleneck_forward.1} parent=1 // pred_region
      %492 = dma.done [#allocation4], 256
    $region53: #{bottleneck_forward.1} parent=1 // pred_fallthru
      _
    %493 = vsyncpa [#allocation4], 1

</llo_original>
